<compile_context>
chip_gen: v5e
topology: v5e:2x2
jax: 0.10.0
libtpu: 0.0.40
codegen_flags: <defaults>
</compile_context>

<pallas_src>
import functools

import jax
import jax.numpy as jnp
from jax.experimental import pallas as pl
from jax.experimental.pallas import tpu as pltpu


# ----------------------------- Pallas kernel --------------------------------
def observer_kernel(data_ref, model_ref,
                    w1d_ref, w1m_ref, b1_ref,
                    w2_ref, b2_ref,
                    w3_ref, b3_ref,
                    w4_ref, b4_ref,
                    out_ref):
    f32 = jnp.float32
    bf16 = jnp.bfloat16

    # Layer 1: fused concat via split-K (data: K=512, model: K=24), bf16 MXU,
    # f32 accumulation.
    h1 = jnp.dot(data_ref[...], w1d_ref[...], preferred_element_type=f32)
    h1 = h1 + jnp.dot(model_ref[...], w1m_ref[...], preferred_element_type=f32)
    h1 = jnp.maximum(h1 + b1_ref[...].astype(f32), 0.0).astype(bf16)

    h2 = jnp.dot(h1, w2_ref[...], preferred_element_type=f32) + b2_ref[...].astype(f32)
    h2 = jnp.maximum(h2, 0.0).astype(bf16)

    h3 = jnp.dot(h2, w3_ref[...], preferred_element_type=f32) + b3_ref[...].astype(f32)
    h3 = jnp.maximum(h3, 0.0).astype(bf16)

    logits = jnp.dot(h3, w4_ref[...], preferred_element_type=f32) + b4_ref[...].astype(f32)
    # (TB, 2) store: masked vst + 8 B/row DMA -- negligible vs. the 1 KiB/row
    # input stream, so we do NOT pad the output to 128 lanes.
    out_ref[...] = jax.nn.sigmoid(logits).astype(out_ref.dtype)


# ------------------------------ Wrapper --------------------------------------
def _round_up(x, m):
    return ((x + m - 1) // m) * m


@functools.partial(jax.jit, static_argnames=("block_batch",))
def observer_forward(data_vec, model_vec, params, *, block_batch=2048):
    """data_vec: [B, data_vector_size], model_vec: [B, model_vector_size]."""
    w1d, w1m, b1, w2, b2, w3, b3, w4, b4 = params

    # Stream activations in bf16 (no-op if the caller already supplies bf16).
    data_vec = data_vec.astype(jnp.bfloat16)
    model_vec = model_vec.astype(jnp.bfloat16)
    b, dk = data_vec.shape
    mk = model_vec.shape[1]
    d1, d2, d3, d4 = w1d.shape[1], w2.shape[1], w3.shape[1], w4.shape[1]

    # Batch tile:
    #   * multiple of 8 (BlockSpec sublane constraint), independent of block_batch
    #   * <= block_batch (VMEM budget)
    #   * <= round_up(ceil(B/2), 8) so the grid has >= 2 steps whenever B > 8,
    #     letting the "parallel" batch axis use both v7x TensorCores.
    bb = max(8, (block_batch // 8) * 8)
    half = _round_up(-(-b // 2), 8)
    tb = min(bb, max(8, half))
    grid = (pl.cdiv(b, tb),)   # last block may be partial; Pallas masks it.

    def act_spec(width):
        return pl.BlockSpec((tb, width), lambda i: (i, 0))

    def resident(arr):
        # Full-array block, same index every grid step -> stays VMEM-resident.
        return pl.BlockSpec(arr.shape, lambda i: (0, 0))

    flops = 2 * b * (dk * d1 + mk * d1 + d1 * d2 + d2 * d3 + d3 * d4)
    param_bytes = 2 * (dk * d1 + mk * d1 + d1
                       + d1 * d2 + d2 + d2 * d3 + d3 + d3 * d4 + d4)
    bytes_accessed = b * (dk + mk) * 2 + b * d4 * 4 + param_bytes

    out = pl.pallas_call(
        observer_kernel,
        out_shape=jax.ShapeDtypeStruct((b, d4), jnp.float32),
        grid=grid,
        in_specs=[
            act_spec(dk),
            act_spec(mk),
            resident(w1d), resident(w1m), resident(b1),
            resident(w2), resident(b2),
            resident(w3), resident(b3),
            resident(w4), resident(b4),
        ],
        out_specs=pl.BlockSpec((tb, d4), lambda i: (i, 0)),
        compiler_params=pltpu.CompilerParams(
            dimension_semantics=("parallel",),
            # ~12 MiB used at TB=2048 in bf16; 48 MiB leaves headroom on every
            # generation (v7x physical VMEM is 64 MiB/TC).
            vmem_limit_bytes=48 * 1024 * 1024,
        ),
        cost_estimate=pl.CostEstimate(
            flops=flops,
            transcendentals=b * d4,
            bytes_accessed=bytes_accessed,
        ),
    )(data_vec, model_vec, *params)
    return out


# -------------------------- Deterministic params ------------------------------
def init_observer_params(key, data_vector_size=512, model_vector_size=24):
    """Mimics PyTorch nn.Linear default init: U(-1/sqrt(fan_in), 1/sqrt(fan_in)).

    W1 is generated at full fan-in (data+model) and split row-wise into
    (W1_data, W1_model) so the in-kernel split-K exactly matches concat @ W1.
    Parameters are stored in bf16 (f32 accumulation happens inside the kernel).
    """
    dims = [data_vector_size + model_vector_size, 256, 128, 64, 2]
    params = []
    for i in range(4):
        fan_in, fan_out = dims[i], dims[i + 1]
        key, kw, kb = jax.random.split(key, 3)
        bound = 1.0 / jnp.sqrt(jnp.float32(fan_in))
        w = jax.random.uniform(kw, (fan_in, fan_out), jnp.float32, -bound, bound)
        b = jax.random.uniform(kb, (1, fan_out), jnp.float32, -bound, bound)
        w = w.astype(jnp.bfloat16)
        b = b.astype(jnp.bfloat16)
        if i == 0:
            params.extend([w[:data_vector_size], w[data_vector_size:], b])
        else:
            params.extend([w, b])
    return tuple(params)


# ------------------------------ Reference ------------------------------------
def observer_ref(data_vec, model_vec, params):
    """Pure-JAX reference mirroring the kernel's dtype path (bf16 / f32 acc)."""
    w1d, w1m, b1, w2, b2, w3, b3, w4, b4 = params
    f32, bf16 = jnp.float32, jnp.bfloat16
    d = data_vec.astype(bf16)
    m = model_vec.astype(bf16)
    # data @ W1d + model @ W1m == concat([data, model]) @ [W1d; W1m]
    h = (jnp.dot(d, w1d, preferred_element_type=f32)
         + jnp.dot(m, w1m, preferred_element_type=f32))
    h = jnp.maximum(h + b1.astype(f32), 0.0).astype(bf16)
    h = jnp.maximum(jnp.dot(h, w2, preferred_element_type=f32) + b2.astype(f32),
                    0.0).astype(bf16)
    h = jnp.maximum(jnp.dot(h, w3, preferred_element_type=f32) + b3.astype(f32),
                    0.0).astype(bf16)
    logits = jnp.dot(h, w4, preferred_element_type=f32) + b4.astype(f32)
    return jax.nn.sigmoid(logits)


if __name__ == "__main__":
    DATA_VEC = 512
    MODEL_VEC = 24
    BATCH = 2

    key = jax.random.PRNGKey(0)
    kp, kd, km = jax.random.split(key, 3)

    params = init_observer_params(kp, DATA_VEC, MODEL_VEC)
    data_vec = jax.random.normal(kd, (BATCH, DATA_VEC), jnp.float32).astype(jnp.bfloat16)
    model_vec = jax.random.normal(km, (BATCH, MODEL_VEC), jnp.float32).astype(jnp.bfloat16)

    # Small-batch path (single padded block, grid=(1,)).
    out = jax.block_until_ready(observer_forward(data_vec, model_vec, params))
    ref = observer_ref(data_vec, model_vec, params)
    assert out.shape == (BATCH, 2), out.shape
    assert bool(jnp.all(jnp.isfinite(out)))
    assert jnp.allclose(out, ref, atol=1e-2, rtol=1e-2), (out, ref)

    # Tiled-batch path with a ragged tail (exercises the batch grid, the
    # >=2-step split, and the masked partial last block -- no wrapper padding).
    B2 = 20
    kd2, km2 = jax.random.split(jax.random.PRNGKey(1))
    dv2 = jax.random.normal(kd2, (B2, DATA_VEC), jnp.float32).astype(jnp.bfloat16)
    mv2 = jax.random.normal(km2, (B2, MODEL_VEC), jnp.float32).astype(jnp.bfloat16)
    out2 = jax.block_until_ready(observer_forward(dv2, mv2, params, block_batch=16))
    ref2 = observer_ref(dv2, mv2, params)
    assert out2.shape == (B2, 2), out2.shape
    assert bool(jnp.all(jnp.isfinite(out2)))
    assert jnp.allclose(out2, ref2, atol=1e-2, rtol=1e-2)

    print("KERNEL_OK")
</pallas_src>

<mosaic_0001>
module attributes {stable_mosaic.version = 11 : i64} {
  func.func @observer_kernel(%arg0: i32, %arg1: memref<8x512xbf16, #tpu.memory_space<vmem>>, %arg2: memref<8x24xbf16, #tpu.memory_space<vmem>>, %arg3: memref<512x256xbf16, #tpu.memory_space<vmem>>, %arg4: memref<24x256xbf16, #tpu.memory_space<vmem>>, %arg5: memref<1x256xbf16, #tpu.memory_space<vmem>>, %arg6: memref<256x128xbf16, #tpu.memory_space<vmem>>, %arg7: memref<1x128xbf16, #tpu.memory_space<vmem>>, %arg8: memref<128x64xbf16, #tpu.memory_space<vmem>>, %arg9: memref<1x64xbf16, #tpu.memory_space<vmem>>, %arg10: memref<64x2xbf16, #tpu.memory_space<vmem>>, %arg11: memref<1x2xbf16, #tpu.memory_space<vmem>>, %arg12: memref<8x2xf32, #tpu.memory_space<vmem>>) attributes {dimension_semantics = [#tpu.dimension_semantics<parallel>], iteration_bounds = array<i64: 1>, scalar_prefetch = 0 : i64, scratch_operands = 0 : i64, tpu.core_type = #tpu.core_type<tc>, window_params = [{transform_indices = @transform_0, window_bounds = array<i64: 8, 512>}, {transform_indices = @transform_1, window_bounds = array<i64: 8, 24>}, {pipeline_mode = #tpu.pipeline_mode<synchronous>, transform_indices = @transform_2, window_bounds = array<i64: 512, 256>}, {pipeline_mode = #tpu.pipeline_mode<synchronous>, transform_indices = @transform_3, window_bounds = array<i64: 24, 256>}, {pipeline_mode = #tpu.pipeline_mode<synchronous>, transform_indices = @transform_4, window_bounds = array<i64: 1, 256>}, {pipeline_mode = #tpu.pipeline_mode<synchronous>, transform_indices = @transform_5, window_bounds = array<i64: 256, 128>}, {pipeline_mode = #tpu.pipeline_mode<synchronous>, transform_indices = @transform_6, window_bounds = array<i64: 1, 128>}, {pipeline_mode = #tpu.pipeline_mode<synchronous>, transform_indices = @transform_7, window_bounds = array<i64: 128, 64>}, {pipeline_mode = #tpu.pipeline_mode<synchronous>, transform_indices = @transform_8, window_bounds = array<i64: 1, 64>}, {pipeline_mode = #tpu.pipeline_mode<synchronous>, transform_indices = @transform_9, window_bounds = array<i64: 64, 2>}, {pipeline_mode = #tpu.pipeline_mode<synchronous>, transform_indices = @transform_10, window_bounds = array<i64: 1, 2>}, {transform_indices = @transform_11, window_bounds = array<i64: 8, 2>}]} {
    %c0 = arith.constant 0 : index
    %c0_0 = arith.constant 0 : index
    %0 = vector.load %arg1[%c0, %c0_0] : memref<8x512xbf16, #tpu.memory_space<vmem>>, vector<8x512xbf16>
    %c0_1 = arith.constant 0 : index
    %c0_2 = arith.constant 0 : index
    %1 = vector.load %arg3[%c0_1, %c0_2] : memref<512x256xbf16, #tpu.memory_space<vmem>>, vector<512x256xbf16>
    %cst = arith.constant dense<0.000000e+00> : vector<8x256xf32>
    %2 = tpu.matmul %0, %1, %cst {dimension_numbers = #tpu.dot_dimension_numbers<[1], [0], [0], [1], [0, 0, 1, 1], [], []>} : vector<8x512xbf16>, vector<512x256xbf16>, vector<8x256xf32> -> vector<8x256xf32>
    %c0_3 = arith.constant 0 : index
    %c0_4 = arith.constant 0 : index
    %3 = vector.load %arg2[%c0_3, %c0_4] : memref<8x24xbf16, #tpu.memory_space<vmem>>, vector<8x24xbf16>
    %c0_5 = arith.constant 0 : index
    %c0_6 = arith.constant 0 : index
    %4 = vector.load %arg4[%c0_5, %c0_6] : memref<24x256xbf16, #tpu.memory_space<vmem>>, vector<24x256xbf16>
    %cst_7 = arith.constant dense<0.000000e+00> : vector<8x256xf32>
    %5 = tpu.matmul %3, %4, %cst_7 {dimension_numbers = #tpu.dot_dimension_numbers<[1], [0], [0], [1], [0, 0, 1, 1], [], []>} : vector<8x24xbf16>, vector<24x256xbf16>, vector<8x256xf32> -> vector<8x256xf32>
    %6 = arith.addf %2, %5 : vector<8x256xf32>
    %c0_8 = arith.constant 0 : index
    %c0_9 = arith.constant 0 : index
    %7 = vector.load %arg5[%c0_8, %c0_9] : memref<1x256xbf16, #tpu.memory_space<vmem>>, vector<1x256xbf16>
    %8 = arith.extf %7 : vector<1x256xbf16> to vector<1x256xf32>
    %9 = vector.broadcast %8 : vector<1x256xf32> to vector<8x256xf32>
    %10 = arith.addf %6, %9 : vector<8x256xf32>
    %cst_10 = arith.constant 0.000000e+00 : f32
    %11 = vector.broadcast %cst_10 : f32 to vector<8x256xf32>
    %12 = arith.maximumf %10, %11 : vector<8x256xf32>
    %13 = arith.truncf %12 : vector<8x256xf32> to vector<8x256xbf16>
    %c0_11 = arith.constant 0 : index
    %c0_12 = arith.constant 0 : index
    %14 = vector.load %arg6[%c0_11, %c0_12] : memref<256x128xbf16, #tpu.memory_space<vmem>>, vector<256x128xbf16>
    %cst_13 = arith.constant dense<0.000000e+00> : vector<8x128xf32>
    %15 = tpu.matmul %13, %14, %cst_13 {dimension_numbers = #tpu.dot_dimension_numbers<[1], [0], [0], [1], [0, 0, 1, 1], [], []>} : vector<8x256xbf16>, vector<256x128xbf16>, vector<8x128xf32> -> vector<8x128xf32>
    %c0_14 = arith.constant 0 : index
    %c0_15 = arith.constant 0 : index
    %16 = vector.load %arg7[%c0_14, %c0_15] : memref<1x128xbf16, #tpu.memory_space<vmem>>, vector<1x128xbf16>
    %17 = arith.extf %16 : vector<1x128xbf16> to vector<1x128xf32>
    %18 = vector.broadcast %17 : vector<1x128xf32> to vector<8x128xf32>
    %19 = arith.addf %15, %18 : vector<8x128xf32>
    %cst_16 = arith.constant 0.000000e+00 : f32
    %20 = vector.broadcast %cst_16 : f32 to vector<8x128xf32>
    %21 = arith.maximumf %19, %20 : vector<8x128xf32>
    %22 = arith.truncf %21 : vector<8x128xf32> to vector<8x128xbf16>
    %c0_17 = arith.constant 0 : index
    %c0_18 = arith.constant 0 : index
    %23 = vector.load %arg8[%c0_17, %c0_18] : memref<128x64xbf16, #tpu.memory_space<vmem>>, vector<128x64xbf16>
    %cst_19 = arith.constant dense<0.000000e+00> : vector<8x64xf32>
    %24 = tpu.matmul %22, %23, %cst_19 {dimension_numbers = #tpu.dot_dimension_numbers<[1], [0], [0], [1], [0, 0, 1, 1], [], []>} : vector<8x128xbf16>, vector<128x64xbf16>, vector<8x64xf32> -> vector<8x64xf32>
    %c0_20 = arith.constant 0 : index
    %c0_21 = arith.constant 0 : index
    %25 = vector.load %arg9[%c0_20, %c0_21] : memref<1x64xbf16, #tpu.memory_space<vmem>>, vector<1x64xbf16>
    %26 = arith.extf %25 : vector<1x64xbf16> to vector<1x64xf32>
    %27 = vector.broadcast %26 : vector<1x64xf32> to vector<8x64xf32>
    %28 = arith.addf %24, %27 : vector<8x64xf32>
    %cst_22 = arith.constant 0.000000e+00 : f32
    %29 = vector.broadcast %cst_22 : f32 to vector<8x64xf32>
    %30 = arith.maximumf %28, %29 : vector<8x64xf32>
    %31 = arith.truncf %30 : vector<8x64xf32> to vector<8x64xbf16>
    %c0_23 = arith.constant 0 : index
    %c0_24 = arith.constant 0 : index
    %32 = vector.load %arg10[%c0_23, %c0_24] : memref<64x2xbf16, #tpu.memory_space<vmem>>, vector<64x2xbf16>
    %cst_25 = arith.constant dense<0.000000e+00> : vector<8x2xf32>
    %33 = tpu.matmul %31, %32, %cst_25 {dimension_numbers = #tpu.dot_dimension_numbers<[1], [0], [0], [1], [0, 0, 1, 1], [], []>} : vector<8x64xbf16>, vector<64x2xbf16>, vector<8x2xf32> -> vector<8x2xf32>
    %c0_26 = arith.constant 0 : index
    %c0_27 = arith.constant 0 : index
    %34 = vector.load %arg11[%c0_26, %c0_27] : memref<1x2xbf16, #tpu.memory_space<vmem>>, vector<1x2xbf16>
    %35 = arith.extf %34 : vector<1x2xbf16> to vector<1x2xf32>
    %36 = vector.broadcast %35 : vector<1x2xf32> to vector<8x2xf32>
    %37 = arith.addf %33, %36 : vector<8x2xf32>
    %38 = arith.negf %37 : vector<8x2xf32>
    %39 = math.exp %38 : vector<8x2xf32>
    %cst_28 = arith.constant 1.000000e+00 : f32
    %40 = vector.broadcast %cst_28 : f32 to vector<8x2xf32>
    %41 = arith.addf %40, %39 : vector<8x2xf32>
    %42 = arith.divf %40, %41 : vector<8x2xf32>
    %c0_29 = arith.constant 0 : index
    %c0_30 = arith.constant 0 : index
    %43 = vector.load %arg12[%c0_29, %c0_30] : memref<8x2xf32, #tpu.memory_space<vmem>>, vector<8x2xf32>
    tpu.vector_store %arg12[%c0_29, %c0_30], %42 {strides = array<i32>} : memref<8x2xf32, #tpu.memory_space<vmem>>, vector<8x2xf32>,
    return
  }
  func.func @transform_0(%arg0: i32) -> (i32, i32) {
    %c0_i32 = arith.constant 0 : i32
    %c0_i32_0 = arith.constant 0 : i32
    return %arg0, %c0_i32 : i32, i32
  }
  func.func @transform_1(%arg0: i32) -> (i32, i32) {
    %c0_i32 = arith.constant 0 : i32
    %c0_i32_0 = arith.constant 0 : i32
    return %arg0, %c0_i32 : i32, i32
  }
  func.func @transform_2(%arg0: i32) -> (i32, i32) {
    %c0_i32 = arith.constant 0 : i32
    %c0_i32_0 = arith.constant 0 : i32
    %c0_i32_1 = arith.constant 0 : i32
    return %c0_i32, %c0_i32_0 : i32, i32
  }
  func.func @transform_3(%arg0: i32) -> (i32, i32) {
    %c0_i32 = arith.constant 0 : i32
    %c0_i32_0 = arith.constant 0 : i32
    %c0_i32_1 = arith.constant 0 : i32
    return %c0_i32, %c0_i32_0 : i32, i32
  }
  func.func @transform_4(%arg0: i32) -> (i32, i32) {
    %c0_i32 = arith.constant 0 : i32
    %c0_i32_0 = arith.constant 0 : i32
    %c0_i32_1 = arith.constant 0 : i32
    return %c0_i32, %c0_i32_0 : i32, i32
  }
  func.func @transform_5(%arg0: i32) -> (i32, i32) {
    %c0_i32 = arith.constant 0 : i32
    %c0_i32_0 = arith.constant 0 : i32
    %c0_i32_1 = arith.constant 0 : i32
    return %c0_i32, %c0_i32_0 : i32, i32
  }
  func.func @transform_6(%arg0: i32) -> (i32, i32) {
    %c0_i32 = arith.constant 0 : i32
    %c0_i32_0 = arith.constant 0 : i32
    %c0_i32_1 = arith.constant 0 : i32
    return %c0_i32, %c0_i32_0 : i32, i32
  }
  func.func @transform_7(%arg0: i32) -> (i32, i32) {
    %c0_i32 = arith.constant 0 : i32
    %c0_i32_0 = arith.constant 0 : i32
    %c0_i32_1 = arith.constant 0 : i32
    return %c0_i32, %c0_i32_0 : i32, i32
  }
  func.func @transform_8(%arg0: i32) -> (i32, i32) {
    %c0_i32 = arith.constant 0 : i32
    %c0_i32_0 = arith.constant 0 : i32
    %c0_i32_1 = arith.constant 0 : i32
    return %c0_i32, %c0_i32_0 : i32, i32
  }
  func.func @transform_9(%arg0: i32) -> (i32, i32) {
    %c0_i32 = arith.constant 0 : i32
    %c0_i32_0 = arith.constant 0 : i32
    %c0_i32_1 = arith.constant 0 : i32
    return %c0_i32, %c0_i32_0 : i32, i32
  }
  func.func @transform_10(%arg0: i32) -> (i32, i32) {
    %c0_i32 = arith.constant 0 : i32
    %c0_i32_0 = arith.constant 0 : i32
    %c0_i32_1 = arith.constant 0 : i32
    return %c0_i32, %c0_i32_0 : i32, i32
  }
  func.func @transform_11(%arg0: i32) -> (i32, i32) {
    %c0_i32 = arith.constant 0 : i32
    %c0_i32_0 = arith.constant 0 : i32
    return %arg0, %c0_i32 : i32, i32
  }
}

</mosaic_0001>

<llo_original>
// kernel: observer_forward.1
$region0: #{observer_forward.1}
  #allocation0 [shape = 'u32[]', space=smem, size = 0x4, offset = 0x4, fixed_abs, tag = 'smem constant byte address 0x4 - core index']
  #allocation1 [shape = 'u32[72,128]{1,0:T(1,128)}', space=vmem, size = 0x9000, scoped, tag = 'internal scratch']
  %s0 = inlined_call_operand.vmem [shape: bf16[2,512], index: 0, kind: input, shape index: {}]
  %s1 = inlined_call_operand.vmem [shape: bf16[2,24], index: 1, kind: input, shape index: {}]
  %s2 = inlined_call_operand.hbm [shape: bf16[512,256], index: 2, kind: input, shape index: {}]
  %s3 = inlined_call_operand.hbm [shape: bf16[24,256], index: 3, kind: input, shape index: {}]
  %s4 = inlined_call_operand.hbm [shape: bf16[1,256], index: 4, kind: input, shape index: {}]
  %s5 = inlined_call_operand.vmem [shape: bf16[256,128], index: 5, kind: input, shape index: {}]
  %s6 = inlined_call_operand.hbm [shape: bf16[1,128], index: 6, kind: input, shape index: {}]
  %s7 = inlined_call_operand.vmem [shape: bf16[128,64], index: 7, kind: input, shape index: {}]
  %s8 = inlined_call_operand.vmem [shape: bf16[1,64], index: 8, kind: input, shape index: {}]
  %s9 = inlined_call_operand.vmem [shape: bf16[64,2], index: 9, kind: input, shape index: {}]
  %s10 = inlined_call_operand.vmem [shape: bf16[1,2], index: 10, kind: input, shape index: {}]
  %s11 = inlined_call_operand.hbm [shape: f32[2,2], index: 11, kind: output, shape index: {}]
  %s12 = sld [smem:[#allocation0]]
  $region70: #{observer_forward.1} parent=0
    _
  %s14 = ssub.s32 1, %s12
  %s15 = scalar_select 0, %s14, %s12
  $region1: #{observer_forward.1} parent=0
    #allocation2 [shape = 'u8[262144]{0}', space=vmem, size = 0x40000, scoped, tag = 'input window, operand 2, single buffered']
    #allocation3 [shape = 's32[1]{0}', space=sflag, size = 0x4, scoped, tag = 'scoped memory for observer_forward.1']
    #allocation4 [shape = 's32[1]{0}', space=sflag, size = 0x4, scoped, tag = 'scoped memory for observer_forward.1']
    #allocation5 [shape = 'u8[12288]{0}', space=vmem, size = 0x3000, scoped, tag = 'input window, operand 3, single buffered']
    #allocation6 [shape = 's32[1]{0}', space=sflag, size = 0x4, scoped, tag = 'scoped memory for observer_forward.1']
    #allocation7 [shape = 'u8[1024]{0}', space=vmem, size = 0x400, scoped, tag = 'input window, operand 4, single buffered']
    #allocation8 [shape = 'u8[512]{0}', space=vmem, size = 0x400, scoped, tag = 'input window, operand 6, single buffered']
    #allocation9 [shape = 's32[1]{0}', space=sflag, size = 0x4, scoped, tag = 'scoped memory for observer_forward.1']
    #allocation10 [shape = 'u8[4096]{0}', space=vmem, size = 0x1000, scoped, tag = 'output window, operand 0, single buffered']
    %16 = vsyncpa [#allocation3], 0
    %17 = vsyncpa [#allocation6], 0
    %18 = vsyncpa [#allocation9], 0
    %19 = vsyncpa [#allocation4], 0
    // Predicated region
    $region2: #{observer_forward.1} parent=1 // pred_check
      _
    $region3: #{observer_forward.1} parent=1 // pred_check_branch
      %21 = sbr.rel (0) target = $region5
    $region4: #{observer_forward.1} parent=1 // pred_region
      _
    $region5: #{observer_forward.1} parent=1 // pred_fallthru
      _
    // Predicated region
    $region6: #{observer_forward.1} parent=1 // pred_check
      _
    $region7: #{observer_forward.1} parent=1 // pred_check_branch
      %23 = sbr.rel (0) target = $region9
    $region8: #{observer_forward.1} parent=1 // pred_region
      _
    $region9: #{observer_forward.1} parent=1 // pred_fallthru
      _
    // Predicated region
    $region10: #{observer_forward.1} parent=1 // pred_check
      _
    $region11: #{observer_forward.1} parent=1 // pred_check_branch
      %25 = sbr.rel (0) target = $region13
    $region12: #{observer_forward.1} parent=1 // pred_region
      %27 = vsyncadd [#allocation3], 0
      %s28 = sshll.u32 %s2, 4
      %s29 = int_to_ptr.hbm [resolvable:$true] %s28
      %s30 = sshll.u32 [#allocation2], 4
      %s31 = int_to_ptr.vmem [resolvable:$true] %s30
      %36 = dma.hbm_to_vmem [thread:$0]  %s29, 8192, %s31, [#allocation3], 128, 128, 8
    $region13: #{observer_forward.1} parent=1 // pred_fallthru
      _
    // Predicated region
    $region14: #{observer_forward.1} parent=1 // pred_check
      _
    $region15: #{observer_forward.1} parent=1 // pred_check_branch
      %38 = sbr.rel (0) target = $region17
    $region16: #{observer_forward.1} parent=1 // pred_region
      %40 = vsyncadd [#allocation6], 0
      %s41 = sshll.u32 %s3, 4
      %s42 = int_to_ptr.hbm [resolvable:$true] %s41
      %s43 = sshll.u32 [#allocation5], 4
      %s44 = int_to_ptr.vmem [resolvable:$true] %s43
      %49 = dma.hbm_to_vmem [thread:$0]  %s42, 384, %s44, [#allocation6], 128, 128, 8
    $region17: #{observer_forward.1} parent=1 // pred_fallthru
      _
    // Predicated region
    $region18: #{observer_forward.1} parent=1 // pred_check
      _
    $region19: #{observer_forward.1} parent=1 // pred_check_branch
      %51 = sbr.rel (0) target = $region21
    $region20: #{observer_forward.1} parent=1 // pred_region
      %53 = vsyncadd [#allocation6], 0
      %s55 = sshll.u32 %s4, 4
      %s56 = int_to_ptr.hbm [resolvable:$true] %s55
      %s57 = sshll.u32 [#allocation7], 4
      %s58 = int_to_ptr.vmem [resolvable:$true] %s57
      %60 = dma.hbm_to_vmem [thread:$0]  %s56, 32, %s58, [#allocation6]
    $region21: #{observer_forward.1} parent=1 // pred_fallthru
      _
    // Predicated region
    $region22: #{observer_forward.1} parent=1 // pred_check
      _
    $region23: #{observer_forward.1} parent=1 // pred_check_branch
      %62 = sbr.rel (0) target = $region25
    $region24: #{observer_forward.1} parent=1 // pred_region
      _
    $region25: #{observer_forward.1} parent=1 // pred_fallthru
      _
    // Predicated region
    $region26: #{observer_forward.1} parent=1 // pred_check
      _
    $region27: #{observer_forward.1} parent=1 // pred_check_branch
      %64 = sbr.rel (0) target = $region29
    $region28: #{observer_forward.1} parent=1 // pred_region
      %66 = vsyncadd [#allocation9], 0
      %s68 = sshll.u32 %s6, 4
      %s69 = int_to_ptr.hbm [resolvable:$true] %s68
      %s70 = sshll.u32 [#allocation8], 4
      %s71 = int_to_ptr.vmem [resolvable:$true] %s70
      %73 = dma.hbm_to_vmem [thread:$0]  %s69, 16, %s71, [#allocation9]
    $region29: #{observer_forward.1} parent=1 // pred_fallthru
      _
    // Predicated region
    $region30: #{observer_forward.1} parent=1 // pred_check
      _
    $region31: #{observer_forward.1} parent=1 // pred_check_branch
      %75 = sbr.rel (0) target = $region33
    $region32: #{observer_forward.1} parent=1 // pred_region
      _
    $region33: #{observer_forward.1} parent=1 // pred_fallthru
      _
    // Predicated region
    $region34: #{observer_forward.1} parent=1 // pred_check
      _
    $region35: #{observer_forward.1} parent=1 // pred_check_branch
      %77 = sbr.rel (0) target = $region37
    $region36: #{observer_forward.1} parent=1 // pred_region
      _
    $region37: #{observer_forward.1} parent=1 // pred_fallthru
      _
    // Predicated region
    $region38: #{observer_forward.1} parent=1 // pred_check
      _
    $region39: #{observer_forward.1} parent=1 // pred_check_branch
      %79 = sbr.rel (0) target = $region41
    $region40: #{observer_forward.1} parent=1 // pred_region
      _
    $region41: #{observer_forward.1} parent=1 // pred_fallthru
      _
    // Predicated region
    $region42: #{observer_forward.1} parent=1 // pred_check
      _
    $region43: #{observer_forward.1} parent=1 // pred_check_branch
      %81 = sbr.rel (0) target = $region45
    $region44: #{observer_forward.1} parent=1 // pred_region
      _
    $region45: #{observer_forward.1} parent=1 // pred_fallthru
      _
    // Predicated region
    $region46: #{observer_forward.1} parent=1 // pred_check
      _
    $region47: #{observer_forward.1} parent=1 // pred_check_branch
      %83 = sbr.rel (0) target = $region49
    $region48: #{observer_forward.1} parent=1 // pred_region
      %85 = dma.done [#allocation3], 8192
    $region49: #{observer_forward.1} parent=1 // pred_fallthru
      _
    // Predicated region
    $region50: #{observer_forward.1} parent=1 // pred_check
      _
    $region51: #{observer_forward.1} parent=1 // pred_check_branch
      %87 = sbr.rel (0) target = $region53
    $region52: #{observer_forward.1} parent=1 // pred_region
      %89 = dma.done [#allocation6], 384
    $region53: #{observer_forward.1} parent=1 // pred_fallthru
      _
    // Predicated region
    $region54: #{observer_forward.1} parent=1 // pred_check
      _
    $region55: #{observer_forward.1} parent=1 // pred_check_branch
      %91 = sbr.rel (0) target = $region57
    $region56: #{observer_forward.1} parent=1 // pred_region
      %93 = dma.done [#allocation6], 32
    $region57: #{observer_forward.1} parent=1 // pred_fallthru
      _
    // Predicated region
    $region58: #{observer_forward.1} parent=1 // pred_check
      _
    $region59: #{observer_forward.1} parent=1 // pred_check_branch
      %95 = sbr.rel (0) target = $region61
    $region60: #{observer_forward.1} parent=1 // pred_region
      %97 = dma.done [#allocation9], 16
    $region61: #{observer_forward.1} parent=1 // pred_fallthru
      _
    %v99 = vld [vmem:[%s0] sm:$0xf]
    %v100 = vld [vmem:[%s0 + $0x4] sm:$0xf]
    %v101 = vld [vmem:[%s0 + $0x8] sm:$0xf]
    %v102 = vld [vmem:[%s0 + $0xc] sm:$0xf]
    %v103 = vld [vmem:[#allocation2] sm:$0xff]
    %v104 = vld [vmem:[#allocation2 + $0x8] sm:$0xff]
    %v105 = vld [vmem:[#allocation2 + $0x10] sm:$0xff]
    %v106 = vld [vmem:[#allocation2 + $0x18] sm:$0xff]
    %v107 = vld [vmem:[#allocation2 + $0x20] sm:$0xff]
    %v108 = vld [vmem:[#allocation2 + $0x28] sm:$0xff]
    %v109 = vld [vmem:[#allocation2 + $0x30] sm:$0xff]
    %v110 = vld [vmem:[#allocation2 + $0x38] sm:$0xff]
    %v111 = vld [vmem:[#allocation2 + $0x40] sm:$0xff]
    %v112 = vld [vmem:[#allocation2 + $0x48] sm:$0xff]
    %v113 = vld [vmem:[#allocation2 + $0x50] sm:$0xff]
    %v114 = vld [vmem:[#allocation2 + $0x58] sm:$0xff]
    %v115 = vld [vmem:[#allocation2 + $0x60] sm:$0xff]
    %v116 = vld [vmem:[#allocation2 + $0x68] sm:$0xff]
    %v117 = vld [vmem:[#allocation2 + $0x70] sm:$0xff]
    %v118 = vld [vmem:[#allocation2 + $0x78] sm:$0xff]
    %v119 = vld [vmem:[#allocation2 + $0x80] sm:$0xff]
    %v120 = vld [vmem:[#allocation2 + $0x88] sm:$0xff]
    %v121 = vld [vmem:[#allocation2 + $0x90] sm:$0xff]
    %v122 = vld [vmem:[#allocation2 + $0x98] sm:$0xff]
    %v123 = vld [vmem:[#allocation2 + $0xa0] sm:$0xff]
    %v124 = vld [vmem:[#allocation2 + $0xa8] sm:$0xff]
    %v125 = vld [vmem:[#allocation2 + $0xb0] sm:$0xff]
    %v126 = vld [vmem:[#allocation2 + $0xb8] sm:$0xff]
    %v127 = vld [vmem:[#allocation2 + $0xc0] sm:$0xff]
    %v128 = vld [vmem:[#allocation2 + $0xc8] sm:$0xff]
    %v129 = vld [vmem:[#allocation2 + $0xd0] sm:$0xff]
    %v130 = vld [vmem:[#allocation2 + $0xd8] sm:$0xff]
    %v131 = vld [vmem:[#allocation2 + $0xe0] sm:$0xff]
    %v132 = vld [vmem:[#allocation2 + $0xe8] sm:$0xff]
    %v133 = vld [vmem:[#allocation2 + $0xf0] sm:$0xff]
    %v134 = vld [vmem:[#allocation2 + $0xf8] sm:$0xff]
    %v135 = vld [vmem:[#allocation2 + $0x100] sm:$0xff]
    %v136 = vld [vmem:[#allocation2 + $0x108] sm:$0xff]
    %v137 = vld [vmem:[#allocation2 + $0x110] sm:$0xff]
    %v138 = vld [vmem:[#allocation2 + $0x118] sm:$0xff]
    %v139 = vld [vmem:[#allocation2 + $0x120] sm:$0xff]
    %v140 = vld [vmem:[#allocation2 + $0x128] sm:$0xff]
    %v141 = vld [vmem:[#allocation2 + $0x130] sm:$0xff]
    %v142 = vld [vmem:[#allocation2 + $0x138] sm:$0xff]
    %v143 = vld [vmem:[#allocation2 + $0x140] sm:$0xff]
    %v144 = vld [vmem:[#allocation2 + $0x148] sm:$0xff]
    %v145 = vld [vmem:[#allocation2 + $0x150] sm:$0xff]
    %v146 = vld [vmem:[#allocation2 + $0x158] sm:$0xff]
    %v147 = vld [vmem:[#allocation2 + $0x160] sm:$0xff]
    %v148 = vld [vmem:[#allocation2 + $0x168] sm:$0xff]
    %v149 = vld [vmem:[#allocation2 + $0x170] sm:$0xff]
    %v150 = vld [vmem:[#allocation2 + $0x178] sm:$0xff]
    %v151 = vld [vmem:[#allocation2 + $0x180] sm:$0xff]
    %v152 = vld [vmem:[#allocation2 + $0x188] sm:$0xff]
    %v153 = vld [vmem:[#allocation2 + $0x190] sm:$0xff]
    %v154 = vld [vmem:[#allocation2 + $0x198] sm:$0xff]
    %v155 = vld [vmem:[#allocation2 + $0x1a0] sm:$0xff]
    %v156 = vld [vmem:[#allocation2 + $0x1a8] sm:$0xff]
    %v157 = vld [vmem:[#allocation2 + $0x1b0] sm:$0xff]
    %v158 = vld [vmem:[#allocation2 + $0x1b8] sm:$0xff]
    %v159 = vld [vmem:[#allocation2 + $0x1c0] sm:$0xff]
    %v160 = vld [vmem:[#allocation2 + $0x1c8] sm:$0xff]
    %v161 = vld [vmem:[#allocation2 + $0x1d0] sm:$0xff]
    %v162 = vld [vmem:[#allocation2 + $0x1d8] sm:$0xff]
    %v163 = vld [vmem:[#allocation2 + $0x1e0] sm:$0xff]
    %v164 = vld [vmem:[#allocation2 + $0x1e8] sm:$0xff]
    %v165 = vld [vmem:[#allocation2 + $0x1f0] sm:$0xff]
    %v166 = vld [vmem:[#allocation2 + $0x1f8] sm:$0xff]
    %v167 = vld [vmem:[%s1] sm:$0x1]
    %v168 = vld [vmem:[%s1 + $0x1] sm:$0x1]
    %v169 = vld [vmem:[%s1 + $0x2] sm:$0x1]
    %v170 = vld [vmem:[%s1 + $0x3] sm:$0x1]
    %v171 = vld [vmem:[#allocation5] sm:$0xff]
    %v172 = vld [vmem:[#allocation5 + $0x8] sm:$0xff]
    %v173 = vld [vmem:[#allocation5 + $0x10] sm:$0xff]
    %175 = vst [vmem:[#allocation1] ss:$9 sm:$0xff] %v167
    %s177 = scalar_lea.vmem [#allocation1], 1
    %178 = vst [vmem:[%s177] ss:$9 sm:$0xff] %v168
    %s180 = scalar_lea.vmem [#allocation1], 2
    %181 = vst [vmem:[%s180] ss:$9 sm:$0xff] %v169
    %s183 = scalar_lea.vmem [#allocation1], 3
    %184 = vst [vmem:[%s183] ss:$9 sm:$0xff] %v170
    %v185 = vld [vmem:[#allocation1] sm:$0xff]
    %v189 = vunpack.c.l.b16 %v171
    %v190 = vunpack.c.h.b16 %v171
    %v191 = vunpack.c.l.b16 %v172
    %v192 = vunpack.c.h.b16 %v172
    %v193 = vunpack.c.l.b16 %v173
    %v194 = vunpack.c.h.b16 %v173
    %v195 = vpack.c.b16 %v191, %v189
    %v196 = vpack.c.b16 %v192, %v190
    %v197 = vpack.c.b16 %v193, %v193
    %v198 = vpack.c.b16 %v194, %v194
    %vm201 = vcmask 195584
    %v202 = vsel %vm201, %v185, 0
    %vm204 = vcmask 1043456
    %v206 = vsel %vm204, %v197, 0
    %v209 = vsel %vm204, %v198, 0
    %211 = vmatpush.bf16.msra.mxu0 0
    %212 = vmatpush.bf16.msra.mxu0 0
    %213 = vmatpush.bf16.msra.mxu0 0
    %214 = vmatpush.bf16.msra.mxu0 0
    %215 = vmatpush.bf16.msra.mxu0 0
    %216 = vmatpush.bf16.msra.mxu0 0
    %217 = vmatpush.bf16.msra.mxu0 %v206
    %218 = vmatpush.bf16.msra.mxu0 %v195
    %219 = vmatmul.bf16.gmra.mxu0 %v202
    %v220 = vpop.f32.mrf.mxu0
    %v221 = vadd.f32 0.0, %v220
    %v222 = vpop.f32.mrf.mxu0
    %223 = vdwg.mxu0
    %224 = vmatpush.bf16.msra.mxu0 0
    %225 = vmatpush.bf16.msra.mxu0 0
    %226 = vmatpush.bf16.msra.mxu0 0
    %227 = vmatpush.bf16.msra.mxu0 0
    %228 = vmatpush.bf16.msra.mxu0 0
    %229 = vmatpush.bf16.msra.mxu0 0
    %230 = vmatpush.bf16.msra.mxu0 %v209
    %231 = vmatpush.bf16.msra.mxu0 %v196
    %232 = vmatmul.bf16.gmra.mxu0 %v202
    %v233 = vpop.f32.mrf.mxu0
    %v234 = vadd.f32 0.0, %v233
    %v235 = vpop.f32.mrf.mxu0
    %236 = vdwg.mxu0
    %238 = vst [vmem:[#allocation1] ss:$9 sm:$0xff] %v99
    %s240 = scalar_lea.vmem [#allocation1], 1
    %241 = vst [vmem:[%s240] ss:$9 sm:$0xff] %v100
    %s243 = scalar_lea.vmem [#allocation1], 2
    %244 = vst [vmem:[%s243] ss:$9 sm:$0xff] %v101
    %s246 = scalar_lea.vmem [#allocation1], 3
    %247 = vst [vmem:[%s246] ss:$9 sm:$0xff] %v102
    %v248 = vld [vmem:[#allocation1] sm:$0xff]
    %v249 = vld [vmem:[#allocation1 + $0x9] sm:$0xff]
    %v250 = vld [vmem:[#allocation1 + $0x12] sm:$0xff]
    %v251 = vld [vmem:[#allocation1 + $0x1b] sm:$0xff]
    %v320 = vunpack.c.l.b16 %v103
    %v321 = vunpack.c.h.b16 %v103
    %v322 = vunpack.c.l.b16 %v104
    %v323 = vunpack.c.h.b16 %v104
    %v324 = vunpack.c.l.b16 %v105
    %v325 = vunpack.c.h.b16 %v105
    %v326 = vunpack.c.l.b16 %v106
    %v327 = vunpack.c.h.b16 %v106
    %v328 = vunpack.c.l.b16 %v107
    %v329 = vunpack.c.h.b16 %v107
    %v330 = vunpack.c.l.b16 %v108
    %v331 = vunpack.c.h.b16 %v108
    %v332 = vunpack.c.l.b16 %v109
    %v333 = vunpack.c.h.b16 %v109
    %v334 = vunpack.c.l.b16 %v110
    %v335 = vunpack.c.h.b16 %v110
    %v336 = vunpack.c.l.b16 %v111
    %v337 = vunpack.c.h.b16 %v111
    %v338 = vunpack.c.l.b16 %v112
    %v339 = vunpack.c.h.b16 %v112
    %v340 = vunpack.c.l.b16 %v113
    %v341 = vunpack.c.h.b16 %v113
    %v342 = vunpack.c.l.b16 %v114
    %v343 = vunpack.c.h.b16 %v114
    %v344 = vunpack.c.l.b16 %v115
    %v345 = vunpack.c.h.b16 %v115
    %v346 = vunpack.c.l.b16 %v116
    %v347 = vunpack.c.h.b16 %v116
    %v348 = vunpack.c.l.b16 %v117
    %v349 = vunpack.c.h.b16 %v117
    %v350 = vunpack.c.l.b16 %v118
    %v351 = vunpack.c.h.b16 %v118
    %v352 = vunpack.c.l.b16 %v119
    %v353 = vunpack.c.h.b16 %v119
    %v354 = vunpack.c.l.b16 %v120
    %v355 = vunpack.c.h.b16 %v120
    %v356 = vunpack.c.l.b16 %v121
    %v357 = vunpack.c.h.b16 %v121
    %v358 = vunpack.c.l.b16 %v122
    %v359 = vunpack.c.h.b16 %v122
    %v360 = vunpack.c.l.b16 %v123
    %v361 = vunpack.c.h.b16 %v123
    %v362 = vunpack.c.l.b16 %v124
    %v363 = vunpack.c.h.b16 %v124
    %v364 = vunpack.c.l.b16 %v125
    %v365 = vunpack.c.h.b16 %v125
    %v366 = vunpack.c.l.b16 %v126
    %v367 = vunpack.c.h.b16 %v126
    %v368 = vunpack.c.l.b16 %v127
    %v369 = vunpack.c.h.b16 %v127
    %v370 = vunpack.c.l.b16 %v128
    %v371 = vunpack.c.h.b16 %v128
    %v372 = vunpack.c.l.b16 %v129
    %v373 = vunpack.c.h.b16 %v129
    %v374 = vunpack.c.l.b16 %v130
    %v375 = vunpack.c.h.b16 %v130
    %v376 = vunpack.c.l.b16 %v131
    %v377 = vunpack.c.h.b16 %v131
    %v378 = vunpack.c.l.b16 %v132
    %v379 = vunpack.c.h.b16 %v132
    %v380 = vunpack.c.l.b16 %v133
    %v381 = vunpack.c.h.b16 %v133
    %v382 = vunpack.c.l.b16 %v134
    %v383 = vunpack.c.h.b16 %v134
    %v384 = vunpack.c.l.b16 %v135
    %v385 = vunpack.c.h.b16 %v135
    %v386 = vunpack.c.l.b16 %v136
    %v387 = vunpack.c.h.b16 %v136
    %v388 = vunpack.c.l.b16 %v137
    %v389 = vunpack.c.h.b16 %v137
    %v390 = vunpack.c.l.b16 %v138
    %v391 = vunpack.c.h.b16 %v138
    %v392 = vunpack.c.l.b16 %v139
    %v393 = vunpack.c.h.b16 %v139
    %v394 = vunpack.c.l.b16 %v140
    %v395 = vunpack.c.h.b16 %v140
    %v396 = vunpack.c.l.b16 %v141
    %v397 = vunpack.c.h.b16 %v141
    %v398 = vunpack.c.l.b16 %v142
    %v399 = vunpack.c.h.b16 %v142
    %v400 = vunpack.c.l.b16 %v143
    %v401 = vunpack.c.h.b16 %v143
    %v402 = vunpack.c.l.b16 %v144
    %v403 = vunpack.c.h.b16 %v144
    %v404 = vunpack.c.l.b16 %v145
    %v405 = vunpack.c.h.b16 %v145
    %v406 = vunpack.c.l.b16 %v146
    %v407 = vunpack.c.h.b16 %v146
    %v408 = vunpack.c.l.b16 %v147
    %v409 = vunpack.c.h.b16 %v147
    %v410 = vunpack.c.l.b16 %v148
    %v411 = vunpack.c.h.b16 %v148
    %v412 = vunpack.c.l.b16 %v149
    %v413 = vunpack.c.h.b16 %v149
    %v414 = vunpack.c.l.b16 %v150
    %v415 = vunpack.c.h.b16 %v150
    %v416 = vunpack.c.l.b16 %v151
    %v417 = vunpack.c.h.b16 %v151
    %v418 = vunpack.c.l.b16 %v152
    %v419 = vunpack.c.h.b16 %v152
    %v420 = vunpack.c.l.b16 %v153
    %v421 = vunpack.c.h.b16 %v153
    %v422 = vunpack.c.l.b16 %v154
    %v423 = vunpack.c.h.b16 %v154
    %v424 = vunpack.c.l.b16 %v155
    %v425 = vunpack.c.h.b16 %v155
    %v426 = vunpack.c.l.b16 %v156
    %v427 = vunpack.c.h.b16 %v156
    %v428 = vunpack.c.l.b16 %v157
    %v429 = vunpack.c.h.b16 %v157
    %v430 = vunpack.c.l.b16 %v158
    %v431 = vunpack.c.h.b16 %v158
    %v432 = vunpack.c.l.b16 %v159
    %v433 = vunpack.c.h.b16 %v159
    %v434 = vunpack.c.l.b16 %v160
    %v435 = vunpack.c.h.b16 %v160
    %v436 = vunpack.c.l.b16 %v161
    %v437 = vunpack.c.h.b16 %v161
    %v438 = vunpack.c.l.b16 %v162
    %v439 = vunpack.c.h.b16 %v162
    %v440 = vunpack.c.l.b16 %v163
    %v441 = vunpack.c.h.b16 %v163
    %v442 = vunpack.c.l.b16 %v164
    %v443 = vunpack.c.h.b16 %v164
    %v444 = vunpack.c.l.b16 %v165
    %v445 = vunpack.c.h.b16 %v165
    %v446 = vunpack.c.l.b16 %v166
    %v447 = vunpack.c.h.b16 %v166
    %v448 = vpack.c.b16 %v322, %v320
    %v449 = vpack.c.b16 %v323, %v321
    %v450 = vpack.c.b16 %v326, %v324
    %v451 = vpack.c.b16 %v327, %v325
    %v452 = vpack.c.b16 %v330, %v328
    %v453 = vpack.c.b16 %v331, %v329
    %v454 = vpack.c.b16 %v334, %v332
    %v455 = vpack.c.b16 %v335, %v333
    %v456 = vpack.c.b16 %v338, %v336
    %v457 = vpack.c.b16 %v339, %v337
    %v458 = vpack.c.b16 %v342, %v340
    %v459 = vpack.c.b16 %v343, %v341
    %v460 = vpack.c.b16 %v346, %v344
    %v461 = vpack.c.b16 %v347, %v345
    %v462 = vpack.c.b16 %v350, %v348
    %v463 = vpack.c.b16 %v351, %v349
    %v464 = vpack.c.b16 %v354, %v352
    %v465 = vpack.c.b16 %v355, %v353
    %v466 = vpack.c.b16 %v358, %v356
    %v467 = vpack.c.b16 %v359, %v357
    %v468 = vpack.c.b16 %v362, %v360
    %v469 = vpack.c.b16 %v363, %v361
    %v470 = vpack.c.b16 %v366, %v364
    %v471 = vpack.c.b16 %v367, %v365
    %v472 = vpack.c.b16 %v370, %v368
    %v473 = vpack.c.b16 %v371, %v369
    %v474 = vpack.c.b16 %v374, %v372
    %v475 = vpack.c.b16 %v375, %v373
    %v476 = vpack.c.b16 %v378, %v376
    %v477 = vpack.c.b16 %v379, %v377
    %v478 = vpack.c.b16 %v382, %v380
    %v479 = vpack.c.b16 %v383, %v381
    %v480 = vpack.c.b16 %v386, %v384
    %v481 = vpack.c.b16 %v387, %v385
    %v482 = vpack.c.b16 %v390, %v388
    %v483 = vpack.c.b16 %v391, %v389
    %v484 = vpack.c.b16 %v394, %v392
    %v485 = vpack.c.b16 %v395, %v393
    %v486 = vpack.c.b16 %v398, %v396
    %v487 = vpack.c.b16 %v399, %v397
    %v488 = vpack.c.b16 %v402, %v400
    %v489 = vpack.c.b16 %v403, %v401
    %v490 = vpack.c.b16 %v406, %v404
    %v491 = vpack.c.b16 %v407, %v405
    %v492 = vpack.c.b16 %v410, %v408
    %v493 = vpack.c.b16 %v411, %v409
    %v494 = vpack.c.b16 %v414, %v412
    %v495 = vpack.c.b16 %v415, %v413
    %v496 = vpack.c.b16 %v418, %v416
    %v497 = vpack.c.b16 %v419, %v417
    %v498 = vpack.c.b16 %v422, %v420
    %v499 = vpack.c.b16 %v423, %v421
    %v500 = vpack.c.b16 %v426, %v424
    %v501 = vpack.c.b16 %v427, %v425
    %v502 = vpack.c.b16 %v430, %v428
    %v503 = vpack.c.b16 %v431, %v429
    %v504 = vpack.c.b16 %v434, %v432
    %v505 = vpack.c.b16 %v435, %v433
    %v506 = vpack.c.b16 %v438, %v436
    %v507 = vpack.c.b16 %v439, %v437
    %v508 = vpack.c.b16 %v442, %v440
    %v509 = vpack.c.b16 %v443, %v441
    %v510 = vpack.c.b16 %v446, %v444
    %v511 = vpack.c.b16 %v447, %v445
    %576 = vmatpush.bf16.msra.mxu0 %v462
    %577 = vmatpush.bf16.msra.mxu0 %v460
    %578 = vmatpush.bf16.msra.mxu0 %v458
    %579 = vmatpush.bf16.msra.mxu0 %v456
    %580 = vmatpush.bf16.msra.mxu0 %v454
    %581 = vmatpush.bf16.msra.mxu0 %v452
    %582 = vmatpush.bf16.msra.mxu0 %v450
    %583 = vmatpush.bf16.msra.mxu0 %v448
    %584 = vmatmul.bf16.gmra.mxu0 %v248
    %v585 = vpop.f32.mrf.mxu0
    %v586 = vadd.f32 %v221, %v585
    %v587 = vpop.f32.mrf.mxu0
    %588 = vdwg.mxu0
    %589 = vmatpush.bf16.msra.mxu0 %v478
    %590 = vmatpush.bf16.msra.mxu0 %v476
    %591 = vmatpush.bf16.msra.mxu0 %v474
    %592 = vmatpush.bf16.msra.mxu0 %v472
    %593 = vmatpush.bf16.msra.mxu0 %v470
    %594 = vmatpush.bf16.msra.mxu0 %v468
    %595 = vmatpush.bf16.msra.mxu0 %v466
    %596 = vmatpush.bf16.msra.mxu0 %v464
    %597 = vmatmul.bf16.gmra.mxu0 %v249
    %v598 = vpop.f32.mrf.mxu0
    %v599 = vadd.f32 %v586, %v598
    %v600 = vpop.f32.mrf.mxu0
    %601 = vdwg.mxu0
    %602 = vmatpush.bf16.msra.mxu0 %v494
    %603 = vmatpush.bf16.msra.mxu0 %v492
    %604 = vmatpush.bf16.msra.mxu0 %v490
    %605 = vmatpush.bf16.msra.mxu0 %v488
    %606 = vmatpush.bf16.msra.mxu0 %v486
    %607 = vmatpush.bf16.msra.mxu0 %v484
    %608 = vmatpush.bf16.msra.mxu0 %v482
    %609 = vmatpush.bf16.msra.mxu0 %v480
    %610 = vmatmul.bf16.gmra.mxu0 %v250
    %v611 = vpop.f32.mrf.mxu0
    %v612 = vadd.f32 %v599, %v611
    %v613 = vpop.f32.mrf.mxu0
    %614 = vdwg.mxu0
    %615 = vmatpush.bf16.msra.mxu0 %v510
    %616 = vmatpush.bf16.msra.mxu0 %v508
    %617 = vmatpush.bf16.msra.mxu0 %v506
    %618 = vmatpush.bf16.msra.mxu0 %v504
    %619 = vmatpush.bf16.msra.mxu0 %v502
    %620 = vmatpush.bf16.msra.mxu0 %v500
    %621 = vmatpush.bf16.msra.mxu0 %v498
    %622 = vmatpush.bf16.msra.mxu0 %v496
    %623 = vmatmul.bf16.gmra.mxu0 %v251
    %v624 = vpop.f32.mrf.mxu0
    %v625 = vadd.f32 %v612, %v624
    %v626 = vpop.f32.mrf.mxu0
    %627 = vdwg.mxu0
    %628 = vmatpush.bf16.msra.mxu0 %v463
    %629 = vmatpush.bf16.msra.mxu0 %v461
    %630 = vmatpush.bf16.msra.mxu0 %v459
    %631 = vmatpush.bf16.msra.mxu0 %v457
    %632 = vmatpush.bf16.msra.mxu0 %v455
    %633 = vmatpush.bf16.msra.mxu0 %v453
    %634 = vmatpush.bf16.msra.mxu0 %v451
    %635 = vmatpush.bf16.msra.mxu0 %v449
    %636 = vmatmul.bf16.gmra.mxu0 %v248
    %v637 = vpop.f32.mrf.mxu0
    %v638 = vadd.f32 %v234, %v637
    %v639 = vpop.f32.mrf.mxu0
    %640 = vdwg.mxu0
    %641 = vmatpush.bf16.msra.mxu0 %v479
    %642 = vmatpush.bf16.msra.mxu0 %v477
    %643 = vmatpush.bf16.msra.mxu0 %v475
    %644 = vmatpush.bf16.msra.mxu0 %v473
    %645 = vmatpush.bf16.msra.mxu0 %v471
    %646 = vmatpush.bf16.msra.mxu0 %v469
    %647 = vmatpush.bf16.msra.mxu0 %v467
    %648 = vmatpush.bf16.msra.mxu0 %v465
    %649 = vmatmul.bf16.gmra.mxu0 %v249
    %v650 = vpop.f32.mrf.mxu0
    %v651 = vadd.f32 %v638, %v650
    %v652 = vpop.f32.mrf.mxu0
    %653 = vdwg.mxu0
    %654 = vmatpush.bf16.msra.mxu0 %v495
    %655 = vmatpush.bf16.msra.mxu0 %v493
    %656 = vmatpush.bf16.msra.mxu0 %v491
    %657 = vmatpush.bf16.msra.mxu0 %v489
    %658 = vmatpush.bf16.msra.mxu0 %v487
    %659 = vmatpush.bf16.msra.mxu0 %v485
    %660 = vmatpush.bf16.msra.mxu0 %v483
    %661 = vmatpush.bf16.msra.mxu0 %v481
    %662 = vmatmul.bf16.gmra.mxu0 %v250
    %v663 = vpop.f32.mrf.mxu0
    %v664 = vadd.f32 %v651, %v663
    %v665 = vpop.f32.mrf.mxu0
    %666 = vdwg.mxu0
    %667 = vmatpush.bf16.msra.mxu0 %v511
    %668 = vmatpush.bf16.msra.mxu0 %v509
    %669 = vmatpush.bf16.msra.mxu0 %v507
    %670 = vmatpush.bf16.msra.mxu0 %v505
    %671 = vmatpush.bf16.msra.mxu0 %v503
    %672 = vmatpush.bf16.msra.mxu0 %v501
    %673 = vmatpush.bf16.msra.mxu0 %v499
    %674 = vmatpush.bf16.msra.mxu0 %v497
    %675 = vmatmul.bf16.gmra.mxu0 %v251
    %v676 = vpop.f32.mrf.mxu0
    %v677 = vadd.f32 %v664, %v676
    %v678 = vpop.f32.mrf.mxu0
    %679 = vdwg.mxu0
    %v680 = vld [vmem:[#allocation7] sm:$0x3]
    %v681 = vunpack.c.l.bf16 %v680
    %v683 = vperm.slane %v681, 0
    %v684 = vperm.slane %v681, 2
    %v687 = vperm.slane %v683, 0
    %v688 = vperm.slane %v684, 0
    %v689 = vadd.f32 %v625, %v687
    %v690 = vadd.f32 %v677, %v688
    %v691 = vmax.f32 %v689, 0.0
    %v692 = vmax.f32 %v690, 0.0
    %v693 = vpack.c.bf16 %v691, %v691
    %v694 = vpack.c.bf16 %v692, %v692
    %v695 = vld [vmem:[%s5] sm:$0xf]
    %v696 = vld [vmem:[%s5 + $0x4] sm:$0xf]
    %v697 = vld [vmem:[%s5 + $0x8] sm:$0xf]
    %v698 = vld [vmem:[%s5 + $0xc] sm:$0xf]
    %v699 = vld [vmem:[%s5 + $0x10] sm:$0xf]
    %v700 = vld [vmem:[%s5 + $0x14] sm:$0xf]
    %v701 = vld [vmem:[%s5 + $0x18] sm:$0xf]
    %v702 = vld [vmem:[%s5 + $0x1c] sm:$0xf]
    %v703 = vld [vmem:[%s5 + $0x20] sm:$0xf]
    %v704 = vld [vmem:[%s5 + $0x24] sm:$0xf]
    %v705 = vld [vmem:[%s5 + $0x28] sm:$0xf]
    %v706 = vld [vmem:[%s5 + $0x2c] sm:$0xf]
    %v707 = vld [vmem:[%s5 + $0x30] sm:$0xf]
    %v708 = vld [vmem:[%s5 + $0x34] sm:$0xf]
    %v709 = vld [vmem:[%s5 + $0x38] sm:$0xf]
    %v710 = vld [vmem:[%s5 + $0x3c] sm:$0xf]
    %v711 = vld [vmem:[%s5 + $0x40] sm:$0xf]
    %v712 = vld [vmem:[%s5 + $0x44] sm:$0xf]
    %v713 = vld [vmem:[%s5 + $0x48] sm:$0xf]
    %v714 = vld [vmem:[%s5 + $0x4c] sm:$0xf]
    %v715 = vld [vmem:[%s5 + $0x50] sm:$0xf]
    %v716 = vld [vmem:[%s5 + $0x54] sm:$0xf]
    %v717 = vld [vmem:[%s5 + $0x58] sm:$0xf]
    %v718 = vld [vmem:[%s5 + $0x5c] sm:$0xf]
    %v719 = vld [vmem:[%s5 + $0x60] sm:$0xf]
    %v720 = vld [vmem:[%s5 + $0x64] sm:$0xf]
    %v721 = vld [vmem:[%s5 + $0x68] sm:$0xf]
    %v722 = vld [vmem:[%s5 + $0x6c] sm:$0xf]
    %v723 = vld [vmem:[%s5 + $0x70] sm:$0xf]
    %v724 = vld [vmem:[%s5 + $0x74] sm:$0xf]
    %v725 = vld [vmem:[%s5 + $0x78] sm:$0xf]
    %v726 = vld [vmem:[%s5 + $0x7c] sm:$0xf]
    %v727 = vld [vmem:[#allocation8] sm:$0x1]
    %v728 = vunpack.c.l.bf16 %v727
    %v729 = vperm.slane %v728, 0
    %v762 = vunpack.c.l.b16 %v695
    %v763 = vunpack.c.l.b16 %v696
    %v764 = vunpack.c.l.b16 %v697
    %v765 = vunpack.c.l.b16 %v698
    %v766 = vunpack.c.l.b16 %v699
    %v767 = vunpack.c.l.b16 %v700
    %v768 = vunpack.c.l.b16 %v701
    %v769 = vunpack.c.l.b16 %v702
    %v770 = vunpack.c.l.b16 %v703
    %v771 = vunpack.c.l.b16 %v704
    %v772 = vunpack.c.l.b16 %v705
    %v773 = vunpack.c.l.b16 %v706
    %v774 = vunpack.c.l.b16 %v707
    %v775 = vunpack.c.l.b16 %v708
    %v776 = vunpack.c.l.b16 %v709
    %v777 = vunpack.c.l.b16 %v710
    %v778 = vunpack.c.l.b16 %v711
    %v779 = vunpack.c.l.b16 %v712
    %v780 = vunpack.c.l.b16 %v713
    %v781 = vunpack.c.l.b16 %v714
    %v782 = vunpack.c.l.b16 %v715
    %v783 = vunpack.c.l.b16 %v716
    %v784 = vunpack.c.l.b16 %v717
    %v785 = vunpack.c.l.b16 %v718
    %v786 = vunpack.c.l.b16 %v719
    %v787 = vunpack.c.l.b16 %v720
    %v788 = vunpack.c.l.b16 %v721
    %v789 = vunpack.c.l.b16 %v722
    %v790 = vunpack.c.l.b16 %v723
    %v791 = vunpack.c.l.b16 %v724
    %v792 = vunpack.c.l.b16 %v725
    %v793 = vunpack.c.l.b16 %v726
    %v794 = vpack.c.b16 %v763, %v762
    %v795 = vpack.c.b16 %v765, %v764
    %v796 = vpack.c.b16 %v767, %v766
    %v797 = vpack.c.b16 %v769, %v768
    %v798 = vpack.c.b16 %v771, %v770
    %v799 = vpack.c.b16 %v773, %v772
    %v800 = vpack.c.b16 %v775, %v774
    %v801 = vpack.c.b16 %v777, %v776
    %v802 = vpack.c.b16 %v779, %v778
    %v803 = vpack.c.b16 %v781, %v780
    %v804 = vpack.c.b16 %v783, %v782
    %v805 = vpack.c.b16 %v785, %v784
    %v806 = vpack.c.b16 %v787, %v786
    %v807 = vpack.c.b16 %v789, %v788
    %v808 = vpack.c.b16 %v791, %v790
    %v809 = vpack.c.b16 %v793, %v792
    %826 = vmatpush.bf16.msra.mxu0 %v801
    %827 = vmatpush.bf16.msra.mxu0 %v800
    %828 = vmatpush.bf16.msra.mxu0 %v799
    %829 = vmatpush.bf16.msra.mxu0 %v798
    %830 = vmatpush.bf16.msra.mxu0 %v797
    %831 = vmatpush.bf16.msra.mxu0 %v796
    %832 = vmatpush.bf16.msra.mxu0 %v795
    %833 = vmatpush.bf16.msra.mxu0 %v794
    %834 = vmatmul.bf16.gmra.mxu0 %v693
    %v835 = vpop.f32.mrf.mxu0
    %v836 = vadd.f32 %v729, %v835
    %v837 = vpop.f32.mrf.mxu0
    %838 = vdwg.mxu0
    %839 = vmatpush.bf16.msra.mxu0 %v809
    %840 = vmatpush.bf16.msra.mxu0 %v808
    %841 = vmatpush.bf16.msra.mxu0 %v807
    %842 = vmatpush.bf16.msra.mxu0 %v806
    %843 = vmatpush.bf16.msra.mxu0 %v805
    %844 = vmatpush.bf16.msra.mxu0 %v804
    %845 = vmatpush.bf16.msra.mxu0 %v803
    %846 = vmatpush.bf16.msra.mxu0 %v802
    %847 = vmatmul.bf16.gmra.mxu0 %v694
    %v848 = vpop.f32.mrf.mxu0
    %v849 = vadd.f32 %v836, %v848
    %v850 = vpop.f32.mrf.mxu0
    %851 = vdwg.mxu0
    %v852 = vmax.f32 %v849, 0.0
    %v853 = vpack.c.bf16 %v852, %v852
    %v854 = vld [vmem:[%s7] sm:$0xf]
    %v855 = vld [vmem:[%s7 + $0x4] sm:$0xf]
    %v856 = vld [vmem:[%s7 + $0x8] sm:$0xf]
    %v857 = vld [vmem:[%s7 + $0xc] sm:$0xf]
    %v858 = vld [vmem:[%s7 + $0x10] sm:$0xf]
    %v859 = vld [vmem:[%s7 + $0x14] sm:$0xf]
    %v860 = vld [vmem:[%s7 + $0x18] sm:$0xf]
    %v861 = vld [vmem:[%s7 + $0x1c] sm:$0xf]
    %v862 = vld [vmem:[%s7 + $0x20] sm:$0xf]
    %v863 = vld [vmem:[%s7 + $0x24] sm:$0xf]
    %v864 = vld [vmem:[%s7 + $0x28] sm:$0xf]
    %v865 = vld [vmem:[%s7 + $0x2c] sm:$0xf]
    %v866 = vld [vmem:[%s7 + $0x30] sm:$0xf]
    %v867 = vld [vmem:[%s7 + $0x34] sm:$0xf]
    %v868 = vld [vmem:[%s7 + $0x38] sm:$0xf]
    %v869 = vld [vmem:[%s7 + $0x3c] sm:$0xf]
    %v870 = vld [vmem:[%s8] sm:$0x1]
    %v871 = vunpack.c.l.bf16 %v870
    %v872 = vperm.slane %v871, 0
    %v889 = vunpack.c.l.b16 %v854
    %v890 = vunpack.c.l.b16 %v855
    %v891 = vunpack.c.l.b16 %v856
    %v892 = vunpack.c.l.b16 %v857
    %v893 = vunpack.c.l.b16 %v858
    %v894 = vunpack.c.l.b16 %v859
    %v895 = vunpack.c.l.b16 %v860
    %v896 = vunpack.c.l.b16 %v861
    %v897 = vunpack.c.l.b16 %v862
    %v898 = vunpack.c.l.b16 %v863
    %v899 = vunpack.c.l.b16 %v864
    %v900 = vunpack.c.l.b16 %v865
    %v901 = vunpack.c.l.b16 %v866
    %v902 = vunpack.c.l.b16 %v867
    %v903 = vunpack.c.l.b16 %v868
    %v904 = vunpack.c.l.b16 %v869
    %v905 = vpack.c.b16 %v890, %v889
    %v906 = vpack.c.b16 %v892, %v891
    %v907 = vpack.c.b16 %v894, %v893
    %v908 = vpack.c.b16 %v896, %v895
    %v909 = vpack.c.b16 %v898, %v897
    %v910 = vpack.c.b16 %v900, %v899
    %v911 = vpack.c.b16 %v902, %v901
    %v912 = vpack.c.b16 %v904, %v903
    %921 = vmatpush.bf16.msra.mxu0 %v912
    %922 = vmatpush.bf16.msra.mxu0 %v911
    %923 = vmatpush.bf16.msra.mxu0 %v910
    %924 = vmatpush.bf16.msra.mxu0 %v909
    %925 = vmatpush.bf16.msra.mxu0 %v908
    %926 = vmatpush.bf16.msra.mxu0 %v907
    %927 = vmatpush.bf16.msra.mxu0 %v906
    %928 = vmatpush.bf16.msra.mxu0 %v905
    %929 = vmatmul.bf16.gmra.mxu0 %v853
    %v930 = vpop.f32.mrf.mxu0
    %v931 = vadd.f32 %v872, %v930
    %v932 = vpop.f32.mrf.mxu0
    %933 = vdwg.mxu0
    %v934 = vmax.f32 %v931, 0.0
    %v935 = vpack.c.bf16 %v934, %v934
    %v936 = vld [vmem:[%s9] sm:$0xf]
    %v937 = vld [vmem:[%s9 + $0x4] sm:$0xf]
    %v938 = vld [vmem:[%s9 + $0x8] sm:$0xf]
    %v939 = vld [vmem:[%s9 + $0xc] sm:$0xf]
    %v940 = vld [vmem:[%s9 + $0x10] sm:$0xf]
    %v941 = vld [vmem:[%s9 + $0x14] sm:$0xf]
    %v942 = vld [vmem:[%s9 + $0x18] sm:$0xf]
    %v943 = vld [vmem:[%s9 + $0x1c] sm:$0xf]
    %v944 = vld [vmem:[%s10] sm:$0x1]
    %v945 = vunpack.c.l.bf16 %v944
    %v946 = vperm.slane %v945, 0
    %v955 = vunpack.c.l.b16 %v936
    %v956 = vunpack.c.l.b16 %v937
    %v957 = vunpack.c.l.b16 %v938
    %v958 = vunpack.c.l.b16 %v939
    %v959 = vunpack.c.l.b16 %v940
    %v960 = vunpack.c.l.b16 %v941
    %v961 = vunpack.c.l.b16 %v942
    %v962 = vunpack.c.l.b16 %v943
    %v963 = vpack.c.b16 %v956, %v955
    %v964 = vpack.c.b16 %v958, %v957
    %v965 = vpack.c.b16 %v960, %v959
    %v966 = vpack.c.b16 %v962, %v961
    %vm971 = vcmask 523264
    %v973 = vsel %vm971, %v935, 0
    %975 = vmatpush.bf16.msra.mxu0 0
    %976 = vmatpush.bf16.msra.mxu0 0
    %977 = vmatpush.bf16.msra.mxu0 0
    %978 = vmatpush.bf16.msra.mxu0 0
    %979 = vmatpush.bf16.msra.mxu0 %v966
    %980 = vmatpush.bf16.msra.mxu0 %v965
    %981 = vmatpush.bf16.msra.mxu0 %v964
    %982 = vmatpush.bf16.msra.mxu0 %v963
    %983 = vmatmul.bf16.gmra.mxu0 %v973
    %v984 = vpop.f32.mrf.mxu0
    %v985 = vadd.f32 %v946, %v984
    %v986 = vpop.f32.mrf.mxu0
    %987 = vdwg.mxu0
    %v988 = vxor.u32 %v985, 2147483648
    %v989 = vmul.f32 %v988, 1.442695
    %v990 = vpow.pop %v989
    %v991 = vadd.f32 %v990, 1.0
    %v992 = vrcp.pop %v991
    %v993 = vmul.f32 %v991, %v992
    %v994 = vsub.f32 1.0, %v993
    %v995 = vmul.f32 %v992, %v994
    %v996 = vadd.f32 %v992, %v995
    %vm997 = vweird.f32 %v991
    %vm998 = vweird.f32 %v992
    %vm999 = vmor %vm997, %vm998
    %v1000 = vsel %vm999, %v992, %v996
    %v1001 = vand.u32 2147483647, %v991
    %vm1002 = vcmp.eq.f32.partialorder %v1001, 8.507059e+37
    %v1003 = vand.u32 %v991, 2147483648
    %v1004 = vor.u32 1.1754944e-38, %v1003
    %v1005 = vsel %vm1002, %v1004, %v1000
    %v1006 = vmul.f32 1.0, %v1005
    %vm1007 = vcmask 15360
    %1008 = vst.msk [vmem:[#allocation10] sm:$0xff] %vm1007, %v1006
    // Predicated region
    $region62: #{observer_forward.1} parent=1 // pred_check
      _
    $region63: #{observer_forward.1} parent=1 // pred_check_branch
      %1010 = sbr.rel (0) target = $region65
    $region64: #{observer_forward.1} parent=1 // pred_region
      %1012 = vsyncadd [#allocation4], 96
      %s1013 = sshll.u32 [#allocation10], 4
      %s1014 = int_to_ptr.vmem [resolvable:$true] %s1013
      %s1015 = sshll.u32 %s11, 4
      %s1016 = int_to_ptr.hbm [resolvable:$true] %s1015
      %1021 = dma.vmem_to_hbm [thread:$0]  %s1014, 32, %s1016, [#allocation4], 32, 32, 2
    $region65: #{observer_forward.1} parent=1 // pred_fallthru
      _
    // Predicated region
    $region66: #{observer_forward.1} parent=1 // pred_check
      _
    $region67: #{observer_forward.1} parent=1 // pred_check_branch
      %1023 = sbr.rel (0) target = $region69
    $region68: #{observer_forward.1} parent=1 // pred_region
      %1025 = dma.done [#allocation4], 128
    $region69: #{observer_forward.1} parent=1 // pred_fallthru
      _
    %1026 = vsyncpa [#allocation3], 1
    %1027 = vsyncpa [#allocation6], 1
    %1028 = vsyncpa [#allocation9], 1
    %1029 = vsyncpa [#allocation4], 1

</llo_original>
